<compile_context>
chip_gen: v5e
topology: v5e:2x2
jax: 0.10.0
libtpu: 0.0.40
codegen_flags: <defaults>
</compile_context>

<pallas_src>
import functools

import jax
import jax.numpy as jnp
from jax.experimental import pallas as pl
from jax.experimental.pallas import tpu as pltpu


def _round_up(x, m):
    return (x + m - 1) // m * m


def _transh_loss_kernel(ep_ref, rp_ref, np_ref, en_ref, rn_ref, nn_ref,
                        out_ref, *, tb, n_valid, need_mask):
    """Fused TransH scoring + margin ranking hinge for one batch tile.

    Inputs are (TB, D) tiles: e = h - t, r, r_norm for positive and negative
    triples of the same batch rows.  Output block is (1, 128): the tile's
    partial hinge-loss sum broadcast across lanes (full-width store).
    """

    def score(e, r, nv):
        # F.normalize(nv, p=2, dim=-1)
        nsq = jnp.sum(nv * nv, axis=-1, keepdims=True)               # (TB, 1)
        n_hat = nv / jnp.maximum(jnp.sqrt(nsq), 1e-12)               # (TB, D)
        # _transfer on (h - t) via linearity, then _calc
        proj = jnp.sum(e * n_hat, axis=-1, keepdims=True)            # (TB, 1)
        d = e - proj * n_hat + r                                      # (TB, D)
        return jnp.sqrt(jnp.sum(d * d, axis=-1, keepdims=True))      # (TB, 1)

    p_score = score(ep_ref[...], rp_ref[...], np_ref[...])
    n_score = score(en_ref[...], rn_ref[...], nn_ref[...])

    # MarginRankingLoss(margin=1.0, size_average=False), target y = -1:
    #   per-row max(0, p - n + 1), summed.
    hinge = jnp.maximum(p_score - n_score + 1.0, 0.0)                 # (TB, 1)

    if need_mask:
        row = (pl.program_id(0) * tb
               + jax.lax.broadcasted_iota(jnp.int32, hinge.shape, 0))
        hinge = jnp.where(row < n_valid, hinge, 0.0)

    partial = jnp.sum(hinge, keepdims=True)                           # (1, 1)
    out_ref[...] = jnp.broadcast_to(partial, out_ref.shape)           # (1, 128)


def transh_margin_loss(e_p, r_p, n_p, e_n, r_n, n_n, *, tb=256):
    """e_*, r_*, n_*: (B, D) float32 -> scalar TransH margin ranking loss."""
    B, D = e_p.shape

    # Sublane-aligned batch tile, capped so double-buffered input tiles
    # (6 streams x 2 buffers) stay well under v7x's 64 MiB/TC VMEM.
    TB = min(tb, _round_up(B, 8))
    max_tb = max(8, ((16 * 1024 * 1024) // (2 * 6 * D * 4)) // 8 * 8)
    TB = min(TB, max_tb)

    Bp = _round_up(B, TB)
    need_mask = Bp != B
    if need_mask:
        pad = ((0, Bp - B), (0, 0))
        e_p, r_p, n_p = (jnp.pad(a, pad) for a in (e_p, r_p, n_p))
        e_n, r_n, n_n = (jnp.pad(a, pad) for a in (e_n, r_n, n_n))

    grid = Bp // TB
    in_spec = pl.BlockSpec((TB, D), lambda i: (i, 0))
    out_spec = pl.BlockSpec((1, 128), lambda i: (i, 0))

    tile_bytes = TB * 6 * D * 4 + 128 * 4
    vmem_limit = int(min(64 * 1024 * 1024, max(8 * 1024 * 1024, 4 * tile_bytes)))

    kernel = functools.partial(_transh_loss_kernel,
                               tb=TB, n_valid=B, need_mask=need_mask)

    partials = pl.pallas_call(
        kernel,
        out_shape=jax.ShapeDtypeStruct((grid, 128), jnp.float32),
        grid_spec=pltpu.PrefetchScalarGridSpec(
            num_scalar_prefetch=0,
            grid=(grid,),
            in_specs=[in_spec] * 6,
            out_specs=out_spec,
        ),
        compiler_params=pltpu.CompilerParams(
            dimension_semantics=("parallel",),
            vmem_limit_bytes=vmem_limit,
        ),
    )(e_p, r_p, n_p, e_n, r_n, n_n)

    return jnp.sum(partials[:, 0])


def xavier_uniform(key, shape, dtype=jnp.float32):
    fan_in, fan_out = shape[0], shape[1]
    limit = (6.0 / (fan_in + fan_out)) ** 0.5
    return jax.random.uniform(key, shape, dtype=dtype, minval=-limit, maxval=limit)


class TransHParams:
    """Deterministic parameter construction mirroring TransH.__init__."""

    def __init__(self, key, entity_num, relation_num, hidden_dim):
        k0, k1, k2 = jax.random.split(key, 3)
        self.ent = xavier_uniform(k0, (entity_num, hidden_dim))     # ent_embeddings
        self.rel = xavier_uniform(k1, (relation_num, hidden_dim))   # rel_embeddings
        self.norm = xavier_uniform(k2, (relation_num, hidden_dim))  # norm_vector


def transh_forward(params: TransHParams,
                   pos_heads, pos_tails, pos_rels,
                   neg_heads, neg_tails, neg_rels):
    """Mirrors TransH.forward: the positive/negative sparse tensors are
    represented by their (heads = indices[0], tails = indices[1],
    rels = values) int arrays.  Returns the scalar MarginRankingLoss
    (margin=1.0, size_average=False => sum, target y = -1)."""
    # Embedding gathers (glue); h - t fused so one entity stream per side.
    e_p = params.ent[pos_heads] - params.ent[pos_tails]   # (B, D)
    r_p = params.rel[pos_rels]                            # (B, D)
    n_p = params.norm[pos_rels]                           # (B, D)
    e_n = params.ent[neg_heads] - params.ent[neg_tails]   # (B, D)
    r_n = params.rel[neg_rels]                            # (B, D)
    n_n = params.norm[neg_rels]                           # (B, D)

    return transh_margin_loss(e_p, r_p, n_p, e_n, r_n, n_n)


def _ref_forward(params, pos_heads, pos_tails, pos_rels,
                 neg_heads, neg_tails, neg_rels):
    """Pure-JAX transcription of the verbatim PyTorch forward."""
    def transfer(x, norm):
        norm = norm / jnp.maximum(
            jnp.linalg.norm(norm, axis=-1, keepdims=True), 1e-12)
        return x - jnp.sum(x * norm, axis=-1, keepdims=True) * norm

    def calc(h, r, t):
        return jnp.linalg.norm(h + r - t, axis=-1)

    def score(hs, ts, rs):
        h = params.ent[hs]
        r = params.rel[rs]
        t = params.ent[ts]
        rn = params.norm[rs]
        return calc(transfer(h, rn), r, transfer(t, rn))

    p = score(pos_heads, pos_tails, pos_rels)
    n = score(neg_heads, neg_tails, neg_rels)
    return jnp.sum(jnp.maximum(p - n + 1.0, 0.0))


if __name__ == "__main__":
    entity_num = 64
    relation_num = 16
    hidden_dim = 32
    batch = 8

    key = jax.random.PRNGKey(0)
    pkey, k1, k2, k3, k4, k5, k6 = jax.random.split(key, 7)
    params = TransHParams(pkey, entity_num, relation_num, hidden_dim)

    pos_heads = jax.random.randint(k1, (batch,), 0, entity_num, dtype=jnp.int32)
    pos_tails = jax.random.randint(k2, (batch,), 0, entity_num, dtype=jnp.int32)
    pos_rels = jax.random.randint(k3, (batch,), 0, relation_num, dtype=jnp.int32)
    neg_heads = jax.random.randint(k4, (batch,), 0, entity_num, dtype=jnp.int32)
    neg_tails = jax.random.randint(k5, (batch,), 0, entity_num, dtype=jnp.int32)
    neg_rels = jax.random.randint(k6, (batch,), 0, relation_num, dtype=jnp.int32)

    loss = transh_forward(params, pos_heads, pos_tails, pos_rels,
                          neg_heads, neg_tails, neg_rels)
    loss = jax.block_until_ready(loss)

    ref = _ref_forward(params, pos_heads, pos_tails, pos_rels,
                       neg_heads, neg_tails, neg_rels)

    assert loss.shape == ()
    assert jnp.allclose(loss, ref, atol=1e-5, rtol=1e-5), (loss, ref)

    print("KERNEL_OK")
</pallas_src>

<mosaic_0001>
module attributes {stable_mosaic.version = 11 : i64} {
  func.func @_transh_loss_kernel(%arg0: i32, %arg1: memref<8x32xf32, #tpu.memory_space<vmem>>, %arg2: memref<8x32xf32, #tpu.memory_space<vmem>>, %arg3: memref<8x32xf32, #tpu.memory_space<vmem>>, %arg4: memref<8x32xf32, #tpu.memory_space<vmem>>, %arg5: memref<8x32xf32, #tpu.memory_space<vmem>>, %arg6: memref<8x32xf32, #tpu.memory_space<vmem>>, %arg7: memref<1x128xf32, #tpu.memory_space<vmem>>) attributes {dimension_semantics = [#tpu.dimension_semantics<parallel>], iteration_bounds = array<i64: 1>, scalar_prefetch = 0 : i64, scratch_operands = 0 : i64, tpu.core_type = #tpu.core_type<tc>, window_params = [{transform_indices = @transform_0, window_bounds = array<i64: 8, 32>}, {transform_indices = @transform_1, window_bounds = array<i64: 8, 32>}, {transform_indices = @transform_2, window_bounds = array<i64: 8, 32>}, {transform_indices = @transform_3, window_bounds = array<i64: 8, 32>}, {transform_indices = @transform_4, window_bounds = array<i64: 8, 32>}, {transform_indices = @transform_5, window_bounds = array<i64: 8, 32>}, {transform_indices = @transform_6, window_bounds = array<i64: 1, 128>}]} {
    %c0 = arith.constant 0 : index
    %c0_0 = arith.constant 0 : index
    %0 = vector.load %arg1[%c0, %c0_0] : memref<8x32xf32, #tpu.memory_space<vmem>>, vector<8x32xf32>
    %c0_1 = arith.constant 0 : index
    %c0_2 = arith.constant 0 : index
    %1 = vector.load %arg2[%c0_1, %c0_2] : memref<8x32xf32, #tpu.memory_space<vmem>>, vector<8x32xf32>
    %c0_3 = arith.constant 0 : index
    %c0_4 = arith.constant 0 : index
    %2 = vector.load %arg3[%c0_3, %c0_4] : memref<8x32xf32, #tpu.memory_space<vmem>>, vector<8x32xf32>
    %3 = arith.mulf %2, %2 : vector<8x32xf32>
    %cst = arith.constant dense<0.000000e+00> : vector<8xf32>
    %4 = vector.multi_reduction <add>, %3, %cst [1] : vector<8x32xf32> to vector<8xf32>
    %5 = vector.shape_cast %4 : vector<8xf32> to vector<8x1xf32>
    %6 = math.sqrt %5 : vector<8x1xf32>
    %cst_5 = arith.constant 9.99999996E-13 : f32
    %7 = vector.broadcast %cst_5 : f32 to vector<8x1xf32>
    %8 = arith.maximumf %6, %7 : vector<8x1xf32>
    %9 = vector.broadcast %8 : vector<8x1xf32> to vector<8x32xf32>
    %10 = arith.divf %2, %9 : vector<8x32xf32>
    %11 = arith.mulf %0, %10 : vector<8x32xf32>
    %cst_6 = arith.constant dense<0.000000e+00> : vector<8xf32>
    %12 = vector.multi_reduction <add>, %11, %cst_6 [1] : vector<8x32xf32> to vector<8xf32>
    %13 = vector.shape_cast %12 : vector<8xf32> to vector<8x1xf32>
    %14 = vector.broadcast %13 : vector<8x1xf32> to vector<8x32xf32>
    %15 = arith.mulf %14, %10 : vector<8x32xf32>
    %16 = arith.subf %0, %15 : vector<8x32xf32>
    %17 = arith.addf %16, %1 : vector<8x32xf32>
    %18 = arith.mulf %17, %17 : vector<8x32xf32>
    %cst_7 = arith.constant dense<0.000000e+00> : vector<8xf32>
    %19 = vector.multi_reduction <add>, %18, %cst_7 [1] : vector<8x32xf32> to vector<8xf32>
    %20 = vector.shape_cast %19 : vector<8xf32> to vector<8x1xf32>
    %21 = math.sqrt %20 : vector<8x1xf32>
    %c0_8 = arith.constant 0 : index
    %c0_9 = arith.constant 0 : index
    %22 = vector.load %arg4[%c0_8, %c0_9] : memref<8x32xf32, #tpu.memory_space<vmem>>, vector<8x32xf32>
    %c0_10 = arith.constant 0 : index
    %c0_11 = arith.constant 0 : index
    %23 = vector.load %arg5[%c0_10, %c0_11] : memref<8x32xf32, #tpu.memory_space<vmem>>, vector<8x32xf32>
    %c0_12 = arith.constant 0 : index
    %c0_13 = arith.constant 0 : index
    %24 = vector.load %arg6[%c0_12, %c0_13] : memref<8x32xf32, #tpu.memory_space<vmem>>, vector<8x32xf32>
    %25 = arith.mulf %24, %24 : vector<8x32xf32>
    %cst_14 = arith.constant dense<0.000000e+00> : vector<8xf32>
    %26 = vector.multi_reduction <add>, %25, %cst_14 [1] : vector<8x32xf32> to vector<8xf32>
    %27 = vector.shape_cast %26 : vector<8xf32> to vector<8x1xf32>
    %28 = math.sqrt %27 : vector<8x1xf32>
    %cst_15 = arith.constant 9.99999996E-13 : f32
    %29 = vector.broadcast %cst_15 : f32 to vector<8x1xf32>
    %30 = arith.maximumf %28, %29 : vector<8x1xf32>
    %31 = vector.broadcast %30 : vector<8x1xf32> to vector<8x32xf32>
    %32 = arith.divf %24, %31 : vector<8x32xf32>
    %33 = arith.mulf %22, %32 : vector<8x32xf32>
    %cst_16 = arith.constant dense<0.000000e+00> : vector<8xf32>
    %34 = vector.multi_reduction <add>, %33, %cst_16 [1] : vector<8x32xf32> to vector<8xf32>
    %35 = vector.shape_cast %34 : vector<8xf32> to vector<8x1xf32>
    %36 = vector.broadcast %35 : vector<8x1xf32> to vector<8x32xf32>
    %37 = arith.mulf %36, %32 : vector<8x32xf32>
    %38 = arith.subf %22, %37 : vector<8x32xf32>
    %39 = arith.addf %38, %23 : vector<8x32xf32>
    %40 = arith.mulf %39, %39 : vector<8x32xf32>
    %cst_17 = arith.constant dense<0.000000e+00> : vector<8xf32>
    %41 = vector.multi_reduction <add>, %40, %cst_17 [1] : vector<8x32xf32> to vector<8xf32>
    %42 = vector.shape_cast %41 : vector<8xf32> to vector<8x1xf32>
    %43 = math.sqrt %42 : vector<8x1xf32>
    %44 = arith.subf %21, %43 : vector<8x1xf32>
    %cst_18 = arith.constant 1.000000e+00 : f32
    %45 = vector.broadcast %cst_18 : f32 to vector<8x1xf32>
    %46 = arith.addf %44, %45 : vector<8x1xf32>
    %cst_19 = arith.constant 0.000000e+00 : f32
    %47 = vector.broadcast %cst_19 : f32 to vector<8x1xf32>
    %48 = arith.maximumf %46, %47 : vector<8x1xf32>
    %49 = vector.shape_cast %48 : vector<8x1xf32> to vector<1x8x1xf32>
    %cst_20 = arith.constant dense<0.000000e+00> : vector<1xf32>
    %50 = vector.multi_reduction <add>, %49, %cst_20 [1, 2] : vector<1x8x1xf32> to vector<1xf32>
    %51 = vector.shape_cast %50 : vector<1xf32> to vector<1x1x1xf32>
    %52 = vector.extract %51[0, 0, 0] : f32 from vector<1x1x1xf32>
    %53 = vector.broadcast %52 : f32 to vector<1x1xf32>
    %54 = vector.shape_cast %53 : vector<1x1xf32> to vector<1x1xf32>
    %55 = vector.broadcast %54 : vector<1x1xf32> to vector<1x128xf32>
    %c0_21 = arith.constant 0 : index
    %c0_22 = arith.constant 0 : index
    %56 = vector.load %arg7[%c0_21, %c0_22] : memref<1x128xf32, #tpu.memory_space<vmem>>, vector<1x128xf32>
    tpu.vector_store %arg7[%c0_21, %c0_22], %55 {strides = array<i32>} : memref<1x128xf32, #tpu.memory_space<vmem>>, vector<1x128xf32>,
    return
  }
  func.func @transform_0(%arg0: i32) -> (i32, i32) {
    %c0_i32 = arith.constant 0 : i32
    %c0_i32_0 = arith.constant 0 : i32
    return %arg0, %c0_i32 : i32, i32
  }
  func.func @transform_1(%arg0: i32) -> (i32, i32) {
    %c0_i32 = arith.constant 0 : i32
    %c0_i32_0 = arith.constant 0 : i32
    return %arg0, %c0_i32 : i32, i32
  }
  func.func @transform_2(%arg0: i32) -> (i32, i32) {
    %c0_i32 = arith.constant 0 : i32
    %c0_i32_0 = arith.constant 0 : i32
    return %arg0, %c0_i32 : i32, i32
  }
  func.func @transform_3(%arg0: i32) -> (i32, i32) {
    %c0_i32 = arith.constant 0 : i32
    %c0_i32_0 = arith.constant 0 : i32
    return %arg0, %c0_i32 : i32, i32
  }
  func.func @transform_4(%arg0: i32) -> (i32, i32) {
    %c0_i32 = arith.constant 0 : i32
    %c0_i32_0 = arith.constant 0 : i32
    return %arg0, %c0_i32 : i32, i32
  }
  func.func @transform_5(%arg0: i32) -> (i32, i32) {
    %c0_i32 = arith.constant 0 : i32
    %c0_i32_0 = arith.constant 0 : i32
    return %arg0, %c0_i32 : i32, i32
  }
  func.func @transform_6(%arg0: i32) -> (i32, i32) {
    %c0_i32 = arith.constant 0 : i32
    %c0_i32_0 = arith.constant 0 : i32
    return %arg0, %c0_i32 : i32, i32
  }
}

</mosaic_0001>

<llo_original>
// kernel: tpu_custom_call.1
$region0: #{tpu_custom_call.1}
  #allocation0 [shape = 'u32[]', space=smem, size = 0x4, offset = 0x4, fixed_abs, tag = 'smem constant byte address 0x4 - core index']
  #allocation1 [shape = 'u32[72,128]{1,0:T(1,128)}', space=vmem, size = 0x9000, scoped, tag = 'internal scratch']
  %s0 = inlined_call_operand.hbm [shape: f32[8,32], index: 0, kind: input, shape index: {}]
  %s1 = inlined_call_operand.hbm [shape: f32[8,32], index: 1, kind: input, shape index: {}]
  %s2 = inlined_call_operand.hbm [shape: f32[8,32], index: 2, kind: input, shape index: {}]
  %s3 = inlined_call_operand.hbm [shape: f32[8,32], index: 3, kind: input, shape index: {}]
  %s4 = inlined_call_operand.hbm [shape: f32[8,32], index: 4, kind: input, shape index: {}]
  %s5 = inlined_call_operand.hbm [shape: f32[8,32], index: 5, kind: input, shape index: {}]
  %s6 = inlined_call_operand.hbm [shape: f32[1,128], index: 6, kind: output, shape index: {}]
  %s7 = sld [smem:[#allocation0]]
  $region58: #{tpu_custom_call.1} parent=0
    _
  %s9 = ssub.s32 1, %s7
  %s10 = scalar_select 0, %s9, %s7
  $region1: #{tpu_custom_call.1} parent=0
    #allocation2 [shape = 'u8[4096]{0}', space=vmem, size = 0x1000, scoped, tag = 'input window, operand 0, single buffered']
    #allocation3 [shape = 's32[1]{0}', space=sflag, size = 0x4, scoped, tag = 'scoped memory for tpu_custom_call.1']
    #allocation4 [shape = 's32[1]{0}', space=sflag, size = 0x4, scoped, tag = 'scoped memory for tpu_custom_call.1']
    #allocation5 [shape = 'u8[4096]{0}', space=vmem, size = 0x1000, scoped, tag = 'input window, operand 1, single buffered']
    #allocation6 [shape = 's32[1]{0}', space=sflag, size = 0x4, scoped, tag = 'scoped memory for tpu_custom_call.1']
    #allocation7 [shape = 'u8[4096]{0}', space=vmem, size = 0x1000, scoped, tag = 'input window, operand 2, single buffered']
    #allocation8 [shape = 'u8[4096]{0}', space=vmem, size = 0x1000, scoped, tag = 'input window, operand 3, single buffered']
    #allocation9 [shape = 's32[1]{0}', space=sflag, size = 0x4, scoped, tag = 'scoped memory for tpu_custom_call.1']
    #allocation10 [shape = 'u8[4096]{0}', space=vmem, size = 0x1000, scoped, tag = 'input window, operand 4, single buffered']
    #allocation11 [shape = 'u8[4096]{0}', space=vmem, size = 0x1000, scoped, tag = 'input window, operand 5, single buffered']
    #allocation12 [shape = 's32[1]{0}', space=sflag, size = 0x4, scoped, tag = 'scoped memory for tpu_custom_call.1']
    #allocation13 [shape = 'u8[512]{0}', space=vmem, size = 0x400, scoped, tag = 'output window, operand 0, single buffered']
    %11 = vsyncpa [#allocation3], 0
    %12 = vsyncpa [#allocation6], 0
    %13 = vsyncpa [#allocation9], 0
    %14 = vsyncpa [#allocation12], 0
    %15 = vsyncpa [#allocation4], 0
    // Predicated region
    $region2: #{tpu_custom_call.1} parent=1 // pred_check
      _
    $region3: #{tpu_custom_call.1} parent=1 // pred_check_branch
      %17 = sbr.rel (0) target = $region5
    $region4: #{tpu_custom_call.1} parent=1 // pred_region
      %19 = vsyncadd [#allocation3], 0
      %s21 = sshll.u32 %s0, 4
      %s22 = int_to_ptr.hbm [resolvable:$true] %s21
      %s23 = sshll.u32 [#allocation2], 4
      %s24 = int_to_ptr.vmem [resolvable:$true] %s23
      %26 = dma.hbm_to_vmem [thread:$0]  %s22, 128, %s24, [#allocation3]
    $region5: #{tpu_custom_call.1} parent=1 // pred_fallthru
      _
    // Predicated region
    $region6: #{tpu_custom_call.1} parent=1 // pred_check
      _
    $region7: #{tpu_custom_call.1} parent=1 // pred_check_branch
      %28 = sbr.rel (0) target = $region9
    $region8: #{tpu_custom_call.1} parent=1 // pred_region
      %30 = vsyncadd [#allocation6], 0
      %s32 = sshll.u32 %s1, 4
      %s33 = int_to_ptr.hbm [resolvable:$true] %s32
      %s34 = sshll.u32 [#allocation5], 4
      %s35 = int_to_ptr.vmem [resolvable:$true] %s34
      %37 = dma.hbm_to_vmem [thread:$0]  %s33, 128, %s35, [#allocation6]
    $region9: #{tpu_custom_call.1} parent=1 // pred_fallthru
      _
    // Predicated region
    $region10: #{tpu_custom_call.1} parent=1 // pred_check
      _
    $region11: #{tpu_custom_call.1} parent=1 // pred_check_branch
      %39 = sbr.rel (0) target = $region13
    $region12: #{tpu_custom_call.1} parent=1 // pred_region
      %41 = vsyncadd [#allocation6], 0
      %s43 = sshll.u32 %s2, 4
      %s44 = int_to_ptr.hbm [resolvable:$true] %s43
      %s45 = sshll.u32 [#allocation7], 4
      %s46 = int_to_ptr.vmem [resolvable:$true] %s45
      %48 = dma.hbm_to_vmem [thread:$0]  %s44, 128, %s46, [#allocation6]
    $region13: #{tpu_custom_call.1} parent=1 // pred_fallthru
      _
    // Predicated region
    $region14: #{tpu_custom_call.1} parent=1 // pred_check
      _
    $region15: #{tpu_custom_call.1} parent=1 // pred_check_branch
      %50 = sbr.rel (0) target = $region17
    $region16: #{tpu_custom_call.1} parent=1 // pred_region
      %52 = vsyncadd [#allocation9], 0
      %s54 = sshll.u32 %s3, 4
      %s55 = int_to_ptr.hbm [resolvable:$true] %s54
      %s56 = sshll.u32 [#allocation8], 4
      %s57 = int_to_ptr.vmem [resolvable:$true] %s56
      %59 = dma.hbm_to_vmem [thread:$0]  %s55, 128, %s57, [#allocation9]
    $region17: #{tpu_custom_call.1} parent=1 // pred_fallthru
      _
    // Predicated region
    $region18: #{tpu_custom_call.1} parent=1 // pred_check
      _
    $region19: #{tpu_custom_call.1} parent=1 // pred_check_branch
      %61 = sbr.rel (0) target = $region21
    $region20: #{tpu_custom_call.1} parent=1 // pred_region
      %63 = vsyncadd [#allocation9], 0
      %s65 = sshll.u32 %s4, 4
      %s66 = int_to_ptr.hbm [resolvable:$true] %s65
      %s67 = sshll.u32 [#allocation10], 4
      %s68 = int_to_ptr.vmem [resolvable:$true] %s67
      %70 = dma.hbm_to_vmem [thread:$0]  %s66, 128, %s68, [#allocation9]
    $region21: #{tpu_custom_call.1} parent=1 // pred_fallthru
      _
    // Predicated region
    $region22: #{tpu_custom_call.1} parent=1 // pred_check
      _
    $region23: #{tpu_custom_call.1} parent=1 // pred_check_branch
      %72 = sbr.rel (0) target = $region25
    $region24: #{tpu_custom_call.1} parent=1 // pred_region
      %74 = vsyncadd [#allocation12], 0
      %s76 = sshll.u32 %s5, 4
      %s77 = int_to_ptr.hbm [resolvable:$true] %s76
      %s78 = sshll.u32 [#allocation11], 4
      %s79 = int_to_ptr.vmem [resolvable:$true] %s78
      %81 = dma.hbm_to_vmem [thread:$0]  %s77, 128, %s79, [#allocation12]
    $region25: #{tpu_custom_call.1} parent=1 // pred_fallthru
      _
    // Predicated region
    $region26: #{tpu_custom_call.1} parent=1 // pred_check
      _
    $region27: #{tpu_custom_call.1} parent=1 // pred_check_branch
      %83 = sbr.rel (0) target = $region29
    $region28: #{tpu_custom_call.1} parent=1 // pred_region
      %85 = dma.done [#allocation3], 128
    $region29: #{tpu_custom_call.1} parent=1 // pred_fallthru
      _
    // Predicated region
    $region30: #{tpu_custom_call.1} parent=1 // pred_check
      _
    $region31: #{tpu_custom_call.1} parent=1 // pred_check_branch
      %87 = sbr.rel (0) target = $region33
    $region32: #{tpu_custom_call.1} parent=1 // pred_region
      %89 = dma.done [#allocation6], 128
    $region33: #{tpu_custom_call.1} parent=1 // pred_fallthru
      _
    // Predicated region
    $region34: #{tpu_custom_call.1} parent=1 // pred_check
      _
    $region35: #{tpu_custom_call.1} parent=1 // pred_check_branch
      %91 = sbr.rel (0) target = $region37
    $region36: #{tpu_custom_call.1} parent=1 // pred_region
      %93 = dma.done [#allocation6], 128
    $region37: #{tpu_custom_call.1} parent=1 // pred_fallthru
      _
    // Predicated region
    $region38: #{tpu_custom_call.1} parent=1 // pred_check
      _
    $region39: #{tpu_custom_call.1} parent=1 // pred_check_branch
      %95 = sbr.rel (0) target = $region41
    $region40: #{tpu_custom_call.1} parent=1 // pred_region
      %97 = dma.done [#allocation9], 128
    $region41: #{tpu_custom_call.1} parent=1 // pred_fallthru
      _
    // Predicated region
    $region42: #{tpu_custom_call.1} parent=1 // pred_check
      _
    $region43: #{tpu_custom_call.1} parent=1 // pred_check_branch
      %99 = sbr.rel (0) target = $region45
    $region44: #{tpu_custom_call.1} parent=1 // pred_region
      %101 = dma.done [#allocation9], 128
    $region45: #{tpu_custom_call.1} parent=1 // pred_fallthru
      _
    // Predicated region
    $region46: #{tpu_custom_call.1} parent=1 // pred_check
      _
    $region47: #{tpu_custom_call.1} parent=1 // pred_check_branch
      %103 = sbr.rel (0) target = $region49
    $region48: #{tpu_custom_call.1} parent=1 // pred_region
      %105 = dma.done [#allocation12], 128
    $region49: #{tpu_custom_call.1} parent=1 // pred_fallthru
      _
    %v106 = vld [vmem:[#allocation2] sm:$0xff]
    %v107 = vld [vmem:[#allocation5] sm:$0xff]
    %v108 = vld [vmem:[#allocation7] sm:$0xff]
    %v109 = vmul.f32 %v108, %v108
    %vm110 = vcmask 261120
    %v111 = vsel %vm110, %v109, 0.0
    %112 = vadd.xlane.f32.xlu0 %v111
    %v113 = vpop.xlane.xlu0 %112
    %v114 = vrsqrt.pop %v113
    %v115 = vmul.f32 %v114, %v113
    %v116 = vmul.f32 %v115, %v114
    %v117 = vmul.f32 0.5, %v116
    %v118 = vsub.f32 1.5, %v117
    %v119 = vmul.f32 %v114, %v118
    %v120 = vmul.f32 %v113, %v119
    %vm121 = vcmp.eq.f32.partialorder %v113, inf
    %v122 = vsel %vm121, %v113, %v120
    %vm123 = vcmp.eq.f32.partialorder %v113, 0.0
    %v124 = vand.u32 %v113, 2147483648
    %v125 = vsel %vm123, %v124, %v122
    %v126 = vmax.f32 %v125, 1e-12
    %v127 = vrcp.pop %v126
    %v128 = vmul.f32 %v126, %v127
    %v129 = vsub.f32 1.0, %v128
    %v130 = vmul.f32 %v127, %v129
    %v131 = vadd.f32 %v127, %v130
    %vm132 = vweird.f32 %v126
    %vm133 = vweird.f32 %v127
    %vm134 = vmor %vm132, %vm133
    %v135 = vsel %vm134, %v127, %v131
    %v136 = vand.u32 2147483647, %v126
    %vm137 = vcmp.eq.f32.partialorder %v136, 8.507059e+37
    %v138 = vand.u32 %v126, 2147483648
    %v139 = vor.u32 1.1754944e-38, %v138
    %v140 = vsel %vm137, %v139, %v135
    %v141 = vmul.f32 %v108, %v140
    %v142 = vmul.f32 %v106, %v141
    %v143 = vsel %vm110, %v142, 0.0
    %144 = vadd.xlane.f32.xlu0 %v143
    %v145 = vpop.xlane.xlu0 %144
    %v146 = vmul.f32 %v145, %v141
    %v147 = vsub.f32 %v106, %v146
    %v148 = vadd.f32 %v147, %v107
    %v149 = vmul.f32 %v148, %v148
    %v150 = vsel %vm110, %v149, 0.0
    %151 = vadd.xlane.f32.xlu0 %v150
    %v152 = vpop.xlane.xlu0 %151
    %v153 = vrsqrt.pop %v152
    %v154 = vmul.f32 %v153, %v152
    %v155 = vmul.f32 %v154, %v153
    %v156 = vmul.f32 0.5, %v155
    %v157 = vsub.f32 1.5, %v156
    %v158 = vmul.f32 %v153, %v157
    %v159 = vmul.f32 %v152, %v158
    %vm160 = vcmp.eq.f32.partialorder %v152, inf
    %v161 = vsel %vm160, %v152, %v159
    %vm162 = vcmp.eq.f32.partialorder %v152, 0.0
    %v163 = vand.u32 %v152, 2147483648
    %v164 = vsel %vm162, %v163, %v161
    %v165 = vld [vmem:[#allocation8] sm:$0xff]
    %v166 = vld [vmem:[#allocation10] sm:$0xff]
    %v167 = vld [vmem:[#allocation11] sm:$0xff]
    %v168 = vmul.f32 %v167, %v167
    %v169 = vsel %vm110, %v168, 0.0
    %170 = vadd.xlane.f32.xlu0 %v169
    %v171 = vpop.xlane.xlu0 %170
    %v172 = vrsqrt.pop %v171
    %v173 = vmul.f32 %v172, %v171
    %v174 = vmul.f32 %v173, %v172
    %v175 = vmul.f32 0.5, %v174
    %v176 = vsub.f32 1.5, %v175
    %v177 = vmul.f32 %v172, %v176
    %v178 = vmul.f32 %v171, %v177
    %vm179 = vcmp.eq.f32.partialorder %v171, inf
    %v180 = vsel %vm179, %v171, %v178
    %vm181 = vcmp.eq.f32.partialorder %v171, 0.0
    %v182 = vand.u32 %v171, 2147483648
    %v183 = vsel %vm181, %v182, %v180
    %v184 = vmax.f32 %v183, 1e-12
    %v185 = vrcp.pop %v184
    %v186 = vmul.f32 %v184, %v185
    %v187 = vsub.f32 1.0, %v186
    %v188 = vmul.f32 %v185, %v187
    %v189 = vadd.f32 %v185, %v188
    %vm190 = vweird.f32 %v184
    %vm191 = vweird.f32 %v185
    %vm192 = vmor %vm190, %vm191
    %v193 = vsel %vm192, %v185, %v189
    %v194 = vand.u32 2147483647, %v184
    %vm195 = vcmp.eq.f32.partialorder %v194, 8.507059e+37
    %v196 = vand.u32 %v184, 2147483648
    %v197 = vor.u32 1.1754944e-38, %v196
    %v198 = vsel %vm195, %v197, %v193
    %v199 = vmul.f32 %v167, %v198
    %v200 = vmul.f32 %v165, %v199
    %v201 = vsel %vm110, %v200, 0.0
    %202 = vadd.xlane.f32.xlu0 %v201
    %v203 = vpop.xlane.xlu0 %202
    %v204 = vmul.f32 %v203, %v199
    %v205 = vsub.f32 %v165, %v204
    %v206 = vadd.f32 %v205, %v166
    %v207 = vmul.f32 %v206, %v206
    %v208 = vsel %vm110, %v207, 0.0
    %209 = vadd.xlane.f32.xlu0 %v208
    %v210 = vpop.xlane.xlu0 %209
    %v211 = vrsqrt.pop %v210
    %v212 = vmul.f32 %v211, %v210
    %v213 = vmul.f32 %v212, %v211
    %v214 = vmul.f32 0.5, %v213
    %v215 = vsub.f32 1.5, %v214
    %v216 = vmul.f32 %v211, %v215
    %v217 = vmul.f32 %v210, %v216
    %vm218 = vcmp.eq.f32.partialorder %v210, inf
    %v219 = vsel %vm218, %v210, %v217
    %vm220 = vcmp.eq.f32.partialorder %v210, 0.0
    %v221 = vand.u32 %v210, 2147483648
    %v222 = vsel %vm220, %v221, %v219
    %v223 = vsub.f32 %v164, %v222
    %v224 = vadd.f32 %v223, 1.0
    %v225 = vmax.f32 %v224, 0.0
    %vm226 = vcmask 7168
    %v227 = vsel %vm226, %v225, 0.0
    %228 = vadd.xlane.f32.xlu0 %v227
    %v229 = vpop.xlane.xlu0 %228
    %v230 = vrot.slane %v229, 4
    %v231 = vadd.f32 %v229, %v230
    %v232 = vrot.slane %v231, 2
    %v233 = vadd.f32 %v231, %v232
    %v234 = vrot.slane %v233, 1
    %v235 = vadd.f32 %v233, %v234
    %s236 = vtos %v235
    %v237 = vstv %s236
    %238 = vst [vmem:[#allocation13] sm:$0x1] %v237
    // Predicated region
    $region50: #{tpu_custom_call.1} parent=1 // pred_check
      _
    $region51: #{tpu_custom_call.1} parent=1 // pred_check_branch
      %240 = sbr.rel (0) target = $region53
    $region52: #{tpu_custom_call.1} parent=1 // pred_region
      %242 = vsyncadd [#allocation4], 0
      %s244 = sshll.u32 [#allocation13], 4
      %s245 = int_to_ptr.vmem [resolvable:$true] %s244
      %s246 = sshll.u32 %s6, 4
      %s247 = int_to_ptr.hbm [resolvable:$true] %s246
      %249 = dma.vmem_to_hbm [thread:$0]  %s245, 16, %s247, [#allocation4]
    $region53: #{tpu_custom_call.1} parent=1 // pred_fallthru
      _
    // Predicated region
    $region54: #{tpu_custom_call.1} parent=1 // pred_check
      _
    $region55: #{tpu_custom_call.1} parent=1 // pred_check_branch
      %251 = sbr.rel (0) target = $region57
    $region56: #{tpu_custom_call.1} parent=1 // pred_region
      %253 = dma.done [#allocation4], 16
    $region57: #{tpu_custom_call.1} parent=1 // pred_fallthru
      _
    %254 = vsyncpa [#allocation3], 1
    %255 = vsyncpa [#allocation6], 1
    %256 = vsyncpa [#allocation9], 1
    %257 = vsyncpa [#allocation12], 1
    %258 = vsyncpa [#allocation4], 1

</llo_original>
